<compile_context>
chip_gen: v5e
topology: v5e:2x2
jax: 0.10.0
libtpu: 0.0.40
codegen_flags: <defaults>
</compile_context>

<pallas_src>
import math
import functools

import jax
import jax.numpy as jnp
from jax.experimental import pallas as pl
from jax.experimental.pallas import tpu as pltpu

# ----------------------------- hash-grid config ------------------------------
N_LEVELS = 16
F_PER_LEVEL = 2          # -> 32 encoded dims
LOG2_HASHMAP = 19
HASHMAP_SIZE = 1 << LOG2_HASHMAP
BASE_RES = 16
PER_LEVEL_SCALE = 1.3819
PRIMES = (1, 2654435761, 805459861)

HIDDEN_DIM = 64
ENC_DIM = N_LEVELS * F_PER_LEVEL   # 32


def _level_meta(level):
    """Per-level grid scale / resolution / table size (tinycudann-style)."""
    scale = BASE_RES * (PER_LEVEL_SCALE ** level) - 1.0
    res = int(math.ceil(scale)) + 1
    hashed = (res ** 3) > HASHMAP_SIZE
    size = HASHMAP_SIZE if hashed else (res + 1) ** 3
    return scale, res, hashed, size


def init_params(key):
    """Deterministic synthetic parameters (hash tables + MLP weights)."""
    keys = jax.random.split(key, N_LEVELS + 3)
    tables = []
    for l in range(N_LEVELS):
        _, _, _, size = _level_meta(l)
        tables.append(jax.random.uniform(
            keys[l], (size, F_PER_LEVEL), jnp.float32, minval=-1e-4, maxval=1e-4))
    w0 = jax.random.normal(keys[N_LEVELS + 0], (ENC_DIM, HIDDEN_DIM), jnp.float32) \
        * math.sqrt(2.0 / ENC_DIM)
    w1 = jax.random.normal(keys[N_LEVELS + 1], (HIDDEN_DIM, HIDDEN_DIM), jnp.float32) \
        * math.sqrt(2.0 / HIDDEN_DIM)
    w2 = jax.random.normal(keys[N_LEVELS + 2], (HIDDEN_DIM, 1), jnp.float32) \
        * math.sqrt(2.0 / HIDDEN_DIM)
    return tables, w0, w1, w2


# ----------------------------- JAX-side encoding glue --------------------------
def hash_encode(x01, tables):
    """Multi-resolution hash-grid encoding with the trilinear reduction fused in.

    x01: [N, 3] in [0, 1].
    Returns enc: [N, 32] (level-major feature layout: l0f0, l0f1, l1f0, ...).
    The data-dependent gather into the big hash tables has no clean Pallas/TPU
    equivalent, so it stays in XLA where it fuses with the interpolation.
    """
    n = x01.shape[0]
    corners = [(dx, dy, dz) for dz in (0, 1) for dy in (0, 1) for dx in (0, 1)]
    level_out = []
    for l in range(N_LEVELS):
        scale, res, hashed, size = _level_meta(l)
        pos = x01 * scale + 0.5
        pos_grid = jnp.floor(pos)
        frac = pos - pos_grid                          # [N, 3]
        pg = pos_grid.astype(jnp.uint32)               # [N, 3]
        acc = jnp.zeros((n, F_PER_LEVEL), x01.dtype)
        for (dx, dy, dz) in corners:
            c = pg + jnp.array([dx, dy, dz], jnp.uint32)   # [N, 3]
            if hashed:
                idx = (c[:, 0] * jnp.uint32(PRIMES[0])) \
                    ^ (c[:, 1] * jnp.uint32(PRIMES[1])) \
                    ^ (c[:, 2] * jnp.uint32(PRIMES[2]))
                idx = idx & jnp.uint32(size - 1)
            else:
                # NOTE: clamp silently aliases out-of-range corners at the grid
                # boundary (harmless for inputs in [-1, 1], unlike exact (res+1)^3
                # addressing in tinycudann).
                idx = c[:, 0] + c[:, 1] * jnp.uint32(res + 1) \
                    + c[:, 2] * jnp.uint32((res + 1) * (res + 1))
                idx = jnp.minimum(idx, jnp.uint32(size - 1))
            w = jnp.ones((n,), x01.dtype)
            for d, dd in enumerate((dx, dy, dz)):
                w = w * (frac[:, d] if dd else (1.0 - frac[:, d]))
            acc = acc + w[:, None] * tables[l][idx.astype(jnp.int32)]   # [N, 2]
        level_out.append(acc)
    return jnp.concatenate(level_out, axis=1)                            # [N, 32]


# ----------------------------- Pallas kernel ----------------------------------
def sdf_mlp_kernel(encT_ref, w0t_ref, w1t_ref, w2_ref, o_ref):
    # encT: [32, TN] bf16 (points on the lane axis).
    # w0t:  [64, 32] bf16, w1t: [64, 64] bf16, w2: [64, 1] f32.  out: [1, TN] f32.
    x = encT_ref[...]
    h = jnp.dot(w0t_ref[...], x, preferred_element_type=jnp.float32)      # [64, TN] MXU
    h = jnp.maximum(h, 0.0).astype(jnp.bfloat16)                          # ReLU (f32) -> bf16
    h = jnp.dot(w1t_ref[...], h, preferred_element_type=jnp.float32)      # [64, TN] MXU
    h = jnp.maximum(h, 0.0)                                               # ReLU (f32)
    # Final 64 -> 1 layer as a VPU multiply + sublane reduce (no 1-wide MXU push);
    # result is lane-dense [1, TN] and stored with an unmasked vst.
    o_ref[...] = jnp.sum(h * w2_ref[...], axis=0, keepdims=True)          # [1, TN]


@functools.partial(jax.jit, static_argnames=("clip_sdf", "tile_n"))
def sdf_forward(x, tables, w0, w1, w2, clip_sdf=None, tile_n=1024):
    """Forward pass of SDFNetwork: x [N,3] in [-1,1] -> sdf [N,1]."""
    x01 = (x + 1.0) * 0.5                               # (x + 1) / 2
    enc = hash_encode(x01, tables)                      # [N, 32] f32 (gather + interp in XLA)

    n = x.shape[0]
    n_pad = pl.cdiv(n, tile_n) * tile_n

    # Transposed, bf16, lane-dense kernel input: [32, n_pad].
    encT = enc.T.astype(jnp.bfloat16)
    if n_pad != n:
        encT = jnp.pad(encT, ((0, 0), (0, n_pad - n)))
    w0t = w0.T.astype(jnp.bfloat16)                     # [64, 32]
    w1t = w1.T.astype(jnp.bfloat16)                     # [64, 64]

    flops = 2 * n_pad * (ENC_DIM * HIDDEN_DIM + HIDDEN_DIM * HIDDEN_DIM + HIDDEN_DIM)
    bytes_accessed = (ENC_DIM * n_pad * 2                 # encT (bf16)
                      + ENC_DIM * HIDDEN_DIM * 2          # w0t
                      + HIDDEN_DIM * HIDDEN_DIM * 2       # w1t
                      + HIDDEN_DIM * 4                    # w2
                      + n_pad * 4)                        # output

    out = pl.pallas_call(
        sdf_mlp_kernel,
        out_shape=jax.ShapeDtypeStruct((1, n_pad), jnp.float32),
        grid=(n_pad // tile_n,),
        in_specs=[
            pl.BlockSpec((ENC_DIM, tile_n), lambda i: (0, i)),
            pl.BlockSpec((HIDDEN_DIM, ENC_DIM), lambda i: (0, 0)),
            pl.BlockSpec((HIDDEN_DIM, HIDDEN_DIM), lambda i: (0, 0)),
            pl.BlockSpec((HIDDEN_DIM, 1), lambda i: (0, 0)),
        ],
        out_specs=pl.BlockSpec((1, tile_n), lambda i: (0, i)),
        compiler_params=pltpu.CompilerParams(
            dimension_semantics=("parallel",),          # shards grid across v7x's 2 TCs
            vmem_limit_bytes=32 * 1024 * 1024),
        cost_estimate=pl.CostEstimate(
            flops=flops, transcendentals=0, bytes_accessed=bytes_accessed),
    )(encT, w0t, w1t, w2)

    out = out[0, :n][:, None]                           # [N, 1]
    if clip_sdf is not None:
        out = jnp.clip(out, -clip_sdf, clip_sdf)
    return out


# ----------------------------- reference (pure JAX) ----------------------------
def sdf_forward_ref(x, tables, w0, w1, w2, clip_sdf=None):
    """Pure-JAX reference mirroring the kernel's tinycudann-style precision:
    bf16 matmul inputs with f32 accumulation, f32 elementwise / final layer."""
    x01 = (x + 1.0) * 0.5
    enc = hash_encode(x01, tables)
    h = jnp.dot(enc.astype(jnp.bfloat16), w0.astype(jnp.bfloat16),
                preferred_element_type=jnp.float32)
    h = jnp.maximum(h, 0.0)
    h = jnp.dot(h.astype(jnp.bfloat16), w1.astype(jnp.bfloat16),
                preferred_element_type=jnp.float32)
    h = jnp.maximum(h, 0.0)
    out = h @ w2
    if clip_sdf is not None:
        out = jnp.clip(out, -clip_sdf, clip_sdf)
    return out


if __name__ == "__main__":
    key = jax.random.PRNGKey(0)
    k_params, k_x = jax.random.split(key)

    tables, w0, w1, w2 = init_params(k_params)

    n_points = 4096                      # -> 4 even grid steps at tile_n=1024
    x = jax.random.uniform(k_x, (n_points, 3), jnp.float32, minval=-1.0, maxval=1.0)

    out = sdf_forward(x, tables, w0, w1, w2)
    out = jax.block_until_ready(out)
    assert out.shape == (n_points, 1), out.shape

    ref = jax.block_until_ready(sdf_forward_ref(x, tables, w0, w1, w2))
    assert jnp.allclose(out, ref, atol=1e-6, rtol=1e-3), float(jnp.max(jnp.abs(out - ref)))

    print("KERNEL_OK")
</pallas_src>

<mosaic_0001>
module attributes {stable_mosaic.version = 11 : i64} {
  func.func @sdf_mlp_kernel(%arg0: i32, %arg1: memref<32x1024xbf16, #tpu.memory_space<vmem>>, %arg2: memref<64x32xbf16, #tpu.memory_space<vmem>>, %arg3: memref<64x64xbf16, #tpu.memory_space<vmem>>, %arg4: memref<64x1xf32, #tpu.memory_space<vmem>>, %arg5: memref<1x1024xf32, #tpu.memory_space<vmem>>) attributes {dimension_semantics = [#tpu.dimension_semantics<parallel>], iteration_bounds = array<i64: 4>, scalar_prefetch = 0 : i64, scratch_operands = 0 : i64, tpu.core_type = #tpu.core_type<tc>, window_params = [{transform_indices = @transform_0, window_bounds = array<i64: 32, 1024>}, {pipeline_mode = #tpu.pipeline_mode<synchronous>, transform_indices = @transform_1, window_bounds = array<i64: 64, 32>}, {pipeline_mode = #tpu.pipeline_mode<synchronous>, transform_indices = @transform_2, window_bounds = array<i64: 64, 64>}, {pipeline_mode = #tpu.pipeline_mode<synchronous>, transform_indices = @transform_3, window_bounds = array<i64: 64, 1>}, {transform_indices = @transform_4, window_bounds = array<i64: 1, 1024>}]} {
    %c0 = arith.constant 0 : index
    %c0_0 = arith.constant 0 : index
    %0 = vector.load %arg1[%c0, %c0_0] : memref<32x1024xbf16, #tpu.memory_space<vmem>>, vector<32x1024xbf16>
    %c0_1 = arith.constant 0 : index
    %c0_2 = arith.constant 0 : index
    %1 = vector.load %arg2[%c0_1, %c0_2] : memref<64x32xbf16, #tpu.memory_space<vmem>>, vector<64x32xbf16>
    %cst = arith.constant dense<0.000000e+00> : vector<64x1024xf32>
    %2 = tpu.matmul %1, %0, %cst {dimension_numbers = #tpu.dot_dimension_numbers<[1], [0], [0], [1], [0, 0, 1, 1], [], []>} : vector<64x32xbf16>, vector<32x1024xbf16>, vector<64x1024xf32> -> vector<64x1024xf32>
    %cst_3 = arith.constant 0.000000e+00 : f32
    %3 = vector.broadcast %cst_3 : f32 to vector<64x1024xf32>
    %4 = arith.maximumf %2, %3 : vector<64x1024xf32>
    %5 = arith.truncf %4 : vector<64x1024xf32> to vector<64x1024xbf16>
    %c0_4 = arith.constant 0 : index
    %c0_5 = arith.constant 0 : index
    %6 = vector.load %arg3[%c0_4, %c0_5] : memref<64x64xbf16, #tpu.memory_space<vmem>>, vector<64x64xbf16>
    %cst_6 = arith.constant dense<0.000000e+00> : vector<64x1024xf32>
    %7 = tpu.matmul %6, %5, %cst_6 {dimension_numbers = #tpu.dot_dimension_numbers<[1], [0], [0], [1], [0, 0, 1, 1], [], []>} : vector<64x64xbf16>, vector<64x1024xbf16>, vector<64x1024xf32> -> vector<64x1024xf32>
    %cst_7 = arith.constant 0.000000e+00 : f32
    %8 = vector.broadcast %cst_7 : f32 to vector<64x1024xf32>
    %9 = arith.maximumf %7, %8 : vector<64x1024xf32>
    %c0_8 = arith.constant 0 : index
    %c0_9 = arith.constant 0 : index
    %10 = vector.load %arg4[%c0_8, %c0_9] : memref<64x1xf32, #tpu.memory_space<vmem>>, vector<64x1xf32>
    %11 = vector.broadcast %10 : vector<64x1xf32> to vector<64x1024xf32>
    %12 = arith.mulf %9, %11 : vector<64x1024xf32>
    %cst_10 = arith.constant dense<0.000000e+00> : vector<1024xf32>
    %13 = vector.multi_reduction <add>, %12, %cst_10 [0] : vector<64x1024xf32> to vector<1024xf32>
    %14 = vector.shape_cast %13 : vector<1024xf32> to vector<1x1024xf32>
    %c0_11 = arith.constant 0 : index
    %c0_12 = arith.constant 0 : index
    %15 = vector.load %arg5[%c0_11, %c0_12] : memref<1x1024xf32, #tpu.memory_space<vmem>>, vector<1x1024xf32>
    tpu.vector_store %arg5[%c0_11, %c0_12], %14 {strides = array<i32>} : memref<1x1024xf32, #tpu.memory_space<vmem>>, vector<1x1024xf32>,
    return
  }
  func.func @transform_0(%arg0: i32) -> (i32, i32) {
    %c0_i32 = arith.constant 0 : i32
    %c0_i32_0 = arith.constant 0 : i32
    return %c0_i32, %arg0 : i32, i32
  }
  func.func @transform_1(%arg0: i32) -> (i32, i32) {
    %c0_i32 = arith.constant 0 : i32
    %c0_i32_0 = arith.constant 0 : i32
    %c0_i32_1 = arith.constant 0 : i32
    return %c0_i32, %c0_i32_0 : i32, i32
  }
  func.func @transform_2(%arg0: i32) -> (i32, i32) {
    %c0_i32 = arith.constant 0 : i32
    %c0_i32_0 = arith.constant 0 : i32
    %c0_i32_1 = arith.constant 0 : i32
    return %c0_i32, %c0_i32_0 : i32, i32
  }
  func.func @transform_3(%arg0: i32) -> (i32, i32) {
    %c0_i32 = arith.constant 0 : i32
    %c0_i32_0 = arith.constant 0 : i32
    %c0_i32_1 = arith.constant 0 : i32
    return %c0_i32, %c0_i32_0 : i32, i32
  }
  func.func @transform_4(%arg0: i32) -> (i32, i32) {
    %c0_i32 = arith.constant 0 : i32
    %c0_i32_0 = arith.constant 0 : i32
    return %c0_i32, %arg0 : i32, i32
  }
}

</mosaic_0001>

<llo_original>
// kernel: sdf_forward.1
$region0: #{sdf_forward.1}
  #allocation0 [shape = 'u32[]', space=smem, size = 0x4, offset = 0x4, fixed_abs, tag = 'smem constant byte address 0x4 - core index']
  #allocation1 [shape = 'u32[72,128]{1,0:T(1,128)}', space=vmem, size = 0x9000, scoped, tag = 'internal scratch']
  %s0 = inlined_call_operand.vmem [shape: bf16[32,4096], index: 0, kind: input, shape index: {}]
  %s1 = inlined_call_operand.vmem [shape: bf16[64,32], index: 1, kind: input, shape index: {}]
  %s2 = inlined_call_operand.vmem [shape: bf16[64,64], index: 2, kind: input, shape index: {}]
  %s3 = inlined_call_operand.vmem [shape: f32[64,1], index: 3, kind: input, shape index: {}]
  %s4 = inlined_call_operand.hbm [shape: f32[1,4096], index: 4, kind: output, shape index: {}]
  %s5 = sld [smem:[#allocation0]]
  $region72: #{sdf_forward.1} parent=0
    _
  %s7 = ssub.s32 1, %s5
  %s8 = scalar_select 0, %s7, %s5
  $region1: #{sdf_forward.1} parent=0
    #allocation2 [shape = 'u8[131072]{0}', space=vmem, size = 0x20000, scoped, tag = 'input window, operand 0']
    #allocation3 [shape = 'u8[8192]{0}', space=vmem, size = 0x2000, scoped, tag = 'output window, operand 0']
    #allocation4 [shape = 's32[2]{0}', space=sflag, size = 0x8, scoped, tag = 'scoped memory for sdf_forward.1']
    %9 = vsyncpa [#allocation4], 0
    %s10 = scalar_lea.sflag [#allocation4], 1
    %11 = vsyncpa %s10, 0
    loop: start=0, step=1, limit=6
    $region2: #{sdf_forward.1} parent=1 // loop_pre_header
      _
    $region3: #{sdf_forward.1} parent=1 // loop_header
      %s13 = sphi 0, %s17
      %p14 = scmp.ge.s32.totalorder %s13, 6
      %s23 = sphi 0, %s25
      %s26 = sphi 0, %s23
      %s27 = sphi 0, %s26
      %s43 = sphi 0, %s27
      %s47 = sphi 0, %s47
      %s49 = sphi 0, %s47
      %s50 = sphi 0, %s49
      %s64 = sphi 0, %s50
      %s68 = sphi 0, %s68
      %s70 = sphi 0, %s68
      %s71 = sphi 0, %s70
      %s85 = sphi 0, %s71
      %s89 = sphi 0, %s89
      %s91 = sphi 0, %s89
      %s92 = sphi 0, %s91
      %s106 = sphi 0, %s92
      %s112 = sphi 0, %s114
      %s115 = sphi 0, %s112
      %s116 = sphi 0, %s115
      %s132 = sphi 0, %s116
    $region4: #{sdf_forward.1} parent=1 // loop_header_branch
      %16 = sbr.rel (%p14) target = $region8
    $region5: #{sdf_forward.1} parent=1 // loop_body
      %s18 = ssub.s32 %s13, 1
      %s19 = ssub.s32 %s13, 2
      %s20 = sadd.s32 %s13, 1
      %s21 = ssub.s32 %s13, %s20
      %p22 = scmp.eq.s32.totalorder %s21, 0
      %s24 = sadd.s32 %s23, 1
      %s25 = scalar_select %p22, %s23, %s24
      %p28 = pneg %p22
      %p29 = scmp.eq.s32.totalorder %s13, 3
      %p30 = por %p28, %p29
      %p31 = scmp.ne.s32.totalorder %s23, %s26
      %p32 = scmp.eq.s32.totalorder %s13, 0
      %p33 = por %p31, %p32
      %p34 = scmp.ne.s32.totalorder %s23, %s26
      %p35 = scmp.eq.s32.totalorder %s18, 3
      %p36 = por %p34, %p35
      %p37 = scmp.ne.s32.totalorder %s26, %s27
      %p38 = scmp.eq.s32.totalorder %s18, 0
      %p39 = por %p37, %p38
      %p40 = scmp.ne.s32.totalorder %s26, %s27
      %p41 = scmp.eq.s32.totalorder %s19, 3
      %p42 = por %p40, %p41
      %p44 = scmp.ne.s32.totalorder %s27, %s43
      %p45 = scmp.eq.s32.totalorder %s19, 0
      %p46 = por %p44, %p45
      %s48 = sadd.s32 %s47, 1
      %p51 = scmp.eq.s32.totalorder %s13, 3
      %p52 = scmp.ne.s32.totalorder %s47, %s49
      %p53 = scmp.eq.s32.totalorder %s13, 0
      %p54 = por %p52, %p53
      %p55 = scmp.ne.s32.totalorder %s47, %s49
      %p56 = scmp.eq.s32.totalorder %s18, 3
      %p57 = por %p55, %p56
      %p58 = scmp.ne.s32.totalorder %s49, %s50
      %p59 = scmp.eq.s32.totalorder %s18, 0
      %p60 = por %p58, %p59
      %p61 = scmp.ne.s32.totalorder %s49, %s50
      %p62 = scmp.eq.s32.totalorder %s19, 3
      %p63 = por %p61, %p62
      %p65 = scmp.ne.s32.totalorder %s50, %s64
      %p66 = scmp.eq.s32.totalorder %s19, 0
      %p67 = por %p65, %p66
      %s69 = sadd.s32 %s68, 1
      %p72 = scmp.eq.s32.totalorder %s13, 3
      %p73 = scmp.ne.s32.totalorder %s68, %s70
      %p74 = scmp.eq.s32.totalorder %s13, 0
      %p75 = por %p73, %p74
      %p76 = scmp.ne.s32.totalorder %s68, %s70
      %p77 = scmp.eq.s32.totalorder %s18, 3
      %p78 = por %p76, %p77
      %p79 = scmp.ne.s32.totalorder %s70, %s71
      %p80 = scmp.eq.s32.totalorder %s18, 0
      %p81 = por %p79, %p80
      %p82 = scmp.ne.s32.totalorder %s70, %s71
      %p83 = scmp.eq.s32.totalorder %s19, 3
      %p84 = por %p82, %p83
      %p86 = scmp.ne.s32.totalorder %s71, %s85
      %p87 = scmp.eq.s32.totalorder %s19, 0
      %p88 = por %p86, %p87
      %s90 = sadd.s32 %s89, 1
      %p93 = scmp.eq.s32.totalorder %s13, 3
      %p94 = scmp.ne.s32.totalorder %s89, %s91
      %p95 = scmp.eq.s32.totalorder %s13, 0
      %p96 = por %p94, %p95
      %p97 = scmp.ne.s32.totalorder %s89, %s91
      %p98 = scmp.eq.s32.totalorder %s18, 3
      %p99 = por %p97, %p98
      %p100 = scmp.ne.s32.totalorder %s91, %s92
      %p101 = scmp.eq.s32.totalorder %s18, 0
      %p102 = por %p100, %p101
      %p103 = scmp.ne.s32.totalorder %s91, %s92
      %p104 = scmp.eq.s32.totalorder %s19, 3
      %p105 = por %p103, %p104
      %p107 = scmp.ne.s32.totalorder %s92, %s106
      %p108 = scmp.eq.s32.totalorder %s19, 0
      %p109 = por %p107, %p108
      %s110 = ssub.s32 %s13, %s20
      %p111 = scmp.eq.s32.totalorder %s110, 0
      %s113 = sadd.s32 %s112, 1
      %s114 = scalar_select %p111, %s112, %s113
      %p117 = pneg %p111
      %p118 = scmp.eq.s32.totalorder %s13, 3
      %p119 = por %p117, %p118
      %p120 = scmp.ne.s32.totalorder %s112, %s115
      %p121 = scmp.eq.s32.totalorder %s13, 0
      %p122 = por %p120, %p121
      %p123 = scmp.ne.s32.totalorder %s112, %s115
      %p124 = scmp.eq.s32.totalorder %s18, 3
      %p125 = por %p123, %p124
      %p126 = scmp.ne.s32.totalorder %s115, %s116
      %p127 = scmp.eq.s32.totalorder %s18, 0
      %p128 = por %p126, %p127
      %p129 = scmp.ne.s32.totalorder %s115, %s116
      %p130 = scmp.eq.s32.totalorder %s19, 3
      %p131 = por %p129, %p130
      %p133 = scmp.ne.s32.totalorder %s116, %s132
      %p134 = scmp.eq.s32.totalorder %s19, 0
      %p135 = por %p133, %p134
      %p136 = scmp.le.s32.totalorder 1, %s13
      %p137 = scmp.lt.s32.totalorder %s13, 5
      %p138 = pnand %p136, %p137
      %p139 = pneg %p138
      // Predicated region
      $region9: #{sdf_forward.1} parent=5 // pred_check
        _
      $region10: #{sdf_forward.1} parent=5 // pred_check_branch
        %141 = sbr.rel (%p138) target = $region12
      $region11: #{sdf_forward.1} parent=5 // pred_region
        %s142 = ssub.s32 %s13, 1
        // Predicated region
        $region13: #{sdf_forward.1} parent=11 // pred_check
          %p143 = pneg %p60
        $region14: #{sdf_forward.1} parent=11 // pred_check_branch
          %145 = sbr.rel (%p143) target = $region16
        $region15: #{sdf_forward.1} parent=11 // pred_region
          _
        $region16: #{sdf_forward.1} parent=11 // pred_fallthru
          _
        // Predicated region
        $region17: #{sdf_forward.1} parent=11 // pred_check
          %p146 = pneg %p81
        $region18: #{sdf_forward.1} parent=11 // pred_check_branch
          %148 = sbr.rel (%p146) target = $region20
        $region19: #{sdf_forward.1} parent=11 // pred_region
          _
        $region20: #{sdf_forward.1} parent=11 // pred_fallthru
          _
        // Predicated region
        $region21: #{sdf_forward.1} parent=11 // pred_check
          %p149 = pneg %p102
        $region22: #{sdf_forward.1} parent=11 // pred_check_branch
          %151 = sbr.rel (%p149) target = $region24
        $region23: #{sdf_forward.1} parent=11 // pred_region
          _
        $region24: #{sdf_forward.1} parent=11 // pred_fallthru
          _
      $region12: #{sdf_forward.1} parent=5 // pred_fallthru
        _
      %p152 = scmp.lt.s32.totalorder %s13, 4
      // Predicated region
      $region25: #{sdf_forward.1} parent=5 // pred_check
        %p153 = pneg %p152
      $region26: #{sdf_forward.1} parent=5 // pred_check_branch
        %155 = sbr.rel (%p153) target = $region28
      $region27: #{sdf_forward.1} parent=5 // pred_region
        // Predicated region
        $region29: #{sdf_forward.1} parent=27 // pred_check
          %p156 = pneg %p33
        $region30: #{sdf_forward.1} parent=27 // pred_check_branch
          %158 = sbr.rel (%p156) target = $region32
        $region31: #{sdf_forward.1} parent=27 // pred_region
          %s159 = sand.u32 %s23, 1
          %s160 = sand.u32 %s23, 1
          %s161 = smul.addr %s160, 128
          %s162 = scalar_lea.vmem [#allocation2], %s161
          %s163 = smul.u32 8, %s13
          %s164 = smul.addr %s163, 4
          %s165 = scalar_lea.vmem %s0, %s164
          // Predicated region
          $region33: #{sdf_forward.1} parent=31 // pred_check
            _
          $region34: #{sdf_forward.1} parent=31 // pred_check_branch
            %167 = sbr.rel (0) target = $region36
          $region35: #{sdf_forward.1} parent=31 // pred_region
            // Predicated region
            $region37: #{sdf_forward.1} parent=35 // pred_check
              _
            $region38: #{sdf_forward.1} parent=35 // pred_check_branch
              %169 = sbr.rel (0) target = $region40
            $region39: #{sdf_forward.1} parent=35 // pred_region
              loop: start=0, step=1, limit=1
              $region41: #{sdf_forward.1} parent=39 // loop_pre_header
                _
              $region42: #{sdf_forward.1} parent=39 // loop_header
                %s171 = sphi 0, %s175
                %p172 = scmp.ge.s32.totalorder %s171, 1
                %s176 = sphi %s165, %s165
                %s177 = sphi %s162, %s162
              $region43: #{sdf_forward.1} parent=39 // loop_header_branch
                %174 = sbr.rel (%p172) target = $region47
              $region44: #{sdf_forward.1} parent=39 // loop_body
                %v178 = vld [vmem:[%s176] sm:$0xff]
                %179 = vst [vmem:[%s177] sm:$0xff] %v178
                %v180 = vld [vmem:[%s176 + $0x8] sm:$0xff]
                %181 = vst [vmem:[%s177 + $0x8] sm:$0xff] %v180
                %v182 = vld [vmem:[%s176 + $0x10] sm:$0xff]
                %183 = vst [vmem:[%s177 + $0x10] sm:$0xff] %v182
                %v184 = vld [vmem:[%s176 + $0x18] sm:$0xff]
                %185 = vst [vmem:[%s177 + $0x18] sm:$0xff] %v184
                %v186 = vld [vmem:[%s176 + $0x80] sm:$0xff]
                %187 = vst [vmem:[%s177 + $0x20] sm:$0xff] %v186
                %v188 = vld [vmem:[%s176 + $0x88] sm:$0xff]
                %189 = vst [vmem:[%s177 + $0x28] sm:$0xff] %v188
                %v190 = vld [vmem:[%s176 + $0x90] sm:$0xff]
                %191 = vst [vmem:[%s177 + $0x30] sm:$0xff] %v190
                %v192 = vld [vmem:[%s176 + $0x98] sm:$0xff]
                %193 = vst [vmem:[%s177 + $0x38] sm:$0xff] %v192
                %v194 = vld [vmem:[%s176 + $0x100] sm:$0xff]
                %195 = vst [vmem:[%s177 + $0x40] sm:$0xff] %v194
                %v196 = vld [vmem:[%s176 + $0x108] sm:$0xff]
                %197 = vst [vmem:[%s177 + $0x48] sm:$0xff] %v196
                %v198 = vld [vmem:[%s176 + $0x110] sm:$0xff]
                %199 = vst [vmem:[%s177 + $0x50] sm:$0xff] %v198
                %v200 = vld [vmem:[%s176 + $0x118] sm:$0xff]
                %201 = vst [vmem:[%s177 + $0x58] sm:$0xff] %v200
                %v202 = vld [vmem:[%s176 + $0x180] sm:$0xff]
                %203 = vst [vmem:[%s177 + $0x60] sm:$0xff] %v202
                %v204 = vld [vmem:[%s176 + $0x188] sm:$0xff]
                %205 = vst [vmem:[%s177 + $0x68] sm:$0xff] %v204
                %v206 = vld [vmem:[%s176 + $0x190] sm:$0xff]
                %207 = vst [vmem:[%s177 + $0x70] sm:$0xff] %v206
                %v208 = vld [vmem:[%s176 + $0x198] sm:$0xff]
                %209 = vst [vmem:[%s177 + $0x78] sm:$0xff] %v208
              $region45: #{sdf_forward.1} parent=39 // loop_footer
                %s175 = sadd.s32 1, %s171
              $region46: #{sdf_forward.1} parent=39 // loop_footer_branch
                %170 = sbr.rel target = $region42
              $region47: #{sdf_forward.1} parent=39 // loop_exit
                _
            $region40: #{sdf_forward.1} parent=35 // pred_fallthru
              _
            // Predicated region
            $region48: #{sdf_forward.1} parent=35 // pred_check
              _
            $region49: #{sdf_forward.1} parent=35 // pred_check_branch
              %211 = sbr.rel target = $region51
            $region50: #{sdf_forward.1} parent=35 // pred_region
              _
            $region51: #{sdf_forward.1} parent=35 // pred_fallthru
              _
          $region36: #{sdf_forward.1} parent=31 // pred_fallthru
            _
          %212 = vnop
        $region32: #{sdf_forward.1} parent=27 // pred_fallthru
          _
      $region28: #{sdf_forward.1} parent=5 // pred_fallthru
        _
      %p213 = scmp.le.s32.totalorder 1, %s13
      %p214 = scmp.lt.s32.totalorder %s13, 5
      %p215 = pnand %p213, %p214
      %p216 = pneg %p215
      // Predicated region
      $region52: #{sdf_forward.1} parent=5 // pred_check
        _
      $region53: #{sdf_forward.1} parent=5 // pred_check_branch
        %218 = sbr.rel (%p215) target = $region55
      $region54: #{sdf_forward.1} parent=5 // pred_region
        %s219 = ssub.s32 %s13, 1
        %s220 = sand.u32 %s26, 1
        %s221 = sand.u32 %s26, 1
        %s222 = smul.addr %s221, 128
        %s223 = scalar_lea.vmem [#allocation2], %s222
        // Predicated region
        $region56: #{sdf_forward.1} parent=54 // pred_check
          %p224 = pneg %p39
        $region57: #{sdf_forward.1} parent=54 // pred_check_branch
          %226 = sbr.rel (%p224) target = $region59
        $region58: #{sdf_forward.1} parent=54 // pred_region
          _
        $region59: #{sdf_forward.1} parent=54 // pred_fallthru
          _
        %s227 = sand.u32 %s26, 1
        %s228 = sand.u32 %s26, 1
        %s229 = smul.addr %s228, 128
        %s230 = scalar_lea.vmem [#allocation2], %s229
        %p231 = pneg %p39
        %p232 = pneg %p36
        %p233 = pneg %p60
        %p234 = pneg %p57
        %p235 = pneg %p81
        %p236 = pneg %p78
        %p237 = pneg %p102
        %p238 = pneg %p99
        %p239 = pneg %p128
        %p240 = pneg %p125
        %s241 = sand.u32 %s115, 1
        %s242 = scalar_lea.sflag [#allocation4], %s241
        %s243 = sand.u32 %s115, 1
        %s244 = smul.addr %s243, 8
        %s245 = scalar_lea.vmem [#allocation3], %s244
        %s246 = smul.u32 8, %s18
        %s247 = smul.u32 8, %s18
        %v249 = vld [vmem:[%s223] sm:$0xff]
        %v250 = vld [vmem:[%s223 + $0x8] sm:$0xff]
        %v251 = vld [vmem:[%s223 + $0x10] sm:$0xff]
        %v252 = vld [vmem:[%s223 + $0x18] sm:$0xff]
        %v253 = vld [vmem:[%s223 + $0x20] sm:$0xff]
        %v254 = vld [vmem:[%s223 + $0x28] sm:$0xff]
        %v255 = vld [vmem:[%s223 + $0x30] sm:$0xff]
        %v256 = vld [vmem:[%s223 + $0x38] sm:$0xff]
        %v257 = vld [vmem:[%s223 + $0x40] sm:$0xff]
        %v258 = vld [vmem:[%s223 + $0x48] sm:$0xff]
        %v259 = vld [vmem:[%s223 + $0x50] sm:$0xff]
        %v260 = vld [vmem:[%s223 + $0x58] sm:$0xff]
        %v261 = vld [vmem:[%s223 + $0x60] sm:$0xff]
        %v262 = vld [vmem:[%s223 + $0x68] sm:$0xff]
        %v263 = vld [vmem:[%s223 + $0x70] sm:$0xff]
        %v264 = vld [vmem:[%s223 + $0x78] sm:$0xff]
        %v265 = vld [vmem:[%s1] sm:$0xf]
        %v266 = vld [vmem:[%s1 + $0x4] sm:$0xf]
        %v267 = vld [vmem:[%s1 + $0x8] sm:$0xf]
        %v268 = vld [vmem:[%s1 + $0xc] sm:$0xf]
        %v269 = vld [vmem:[%s1 + $0x10] sm:$0xf]
        %v270 = vld [vmem:[%s1 + $0x14] sm:$0xf]
        %v271 = vld [vmem:[%s1 + $0x18] sm:$0xf]
        %v272 = vld [vmem:[%s1 + $0x1c] sm:$0xf]
        %v281 = vunpack.c.l.b16 %v265
        %v282 = vunpack.c.l.b16 %v266
        %v283 = vunpack.c.l.b16 %v267
        %v284 = vunpack.c.l.b16 %v268
        %v285 = vunpack.c.l.b16 %v269
        %v286 = vunpack.c.l.b16 %v270
        %v287 = vunpack.c.l.b16 %v271
        %v288 = vunpack.c.l.b16 %v272
        %v289 = vpack.c.b16 %v282, %v281
        %v290 = vpack.c.b16 %v284, %v283
        %v291 = vpack.c.b16 %v286, %v285
        %v292 = vpack.c.b16 %v288, %v287
        %v309 = vunpack.c.l.b16 %v249
        %v310 = vunpack.c.h.b16 %v249
        %v311 = vunpack.c.l.b16 %v250
        %v312 = vunpack.c.h.b16 %v250
        %v313 = vunpack.c.l.b16 %v251
        %v314 = vunpack.c.h.b16 %v251
        %v315 = vunpack.c.l.b16 %v252
        %v316 = vunpack.c.h.b16 %v252
        %v317 = vunpack.c.l.b16 %v253
        %v318 = vunpack.c.h.b16 %v253
        %v319 = vunpack.c.l.b16 %v254
        %v320 = vunpack.c.h.b16 %v254
        %v321 = vunpack.c.l.b16 %v255
        %v322 = vunpack.c.h.b16 %v255
        %v323 = vunpack.c.l.b16 %v256
        %v324 = vunpack.c.h.b16 %v256
        %v325 = vunpack.c.l.b16 %v257
        %v326 = vunpack.c.h.b16 %v257
        %v327 = vunpack.c.l.b16 %v258
        %v328 = vunpack.c.h.b16 %v258
        %v329 = vunpack.c.l.b16 %v259
        %v330 = vunpack.c.h.b16 %v259
        %v331 = vunpack.c.l.b16 %v260
        %v332 = vunpack.c.h.b16 %v260
        %v333 = vunpack.c.l.b16 %v261
        %v334 = vunpack.c.h.b16 %v261
        %v335 = vunpack.c.l.b16 %v262
        %v336 = vunpack.c.h.b16 %v262
        %v337 = vunpack.c.l.b16 %v263
        %v338 = vunpack.c.h.b16 %v263
        %v339 = vunpack.c.l.b16 %v264
        %v340 = vunpack.c.h.b16 %v264
        %v341 = vpack.c.b16 %v317, %v309
        %v342 = vpack.c.b16 %v318, %v310
        %v343 = vpack.c.b16 %v319, %v311
        %v344 = vpack.c.b16 %v320, %v312
        %v345 = vpack.c.b16 %v321, %v313
        %v346 = vpack.c.b16 %v322, %v314
        %v347 = vpack.c.b16 %v323, %v315
        %v348 = vpack.c.b16 %v324, %v316
        %v349 = vpack.c.b16 %v333, %v325
        %v350 = vpack.c.b16 %v334, %v326
        %v351 = vpack.c.b16 %v335, %v327
        %v352 = vpack.c.b16 %v336, %v328
        %v353 = vpack.c.b16 %v337, %v329
        %v354 = vpack.c.b16 %v338, %v330
        %v355 = vpack.c.b16 %v339, %v331
        %v356 = vpack.c.b16 %v340, %v332
        %vm373 = vcmask 261120
        %v375 = vsel %vm373, %v289, 0
        %v378 = vsel %vm373, %v290, 0
        %v381 = vsel %vm373, %v291, 0
        %v384 = vsel %vm373, %v292, 0
        %386 = vmatpush.bf16.msra.mxu0 0
        %387 = vmatpush.bf16.msra.mxu0 0
        %388 = vmatpush.bf16.msra.mxu0 0
        %389 = vmatpush.bf16.msra.mxu0 0
        %390 = vmatpush.bf16.msra.mxu0 0
        %391 = vmatpush.bf16.msra.mxu0 0
        %392 = vmatpush.bf16.msra.mxu0 %v349
        %393 = vmatpush.bf16.msra.mxu0 %v341
        %394 = vmatmul.bf16.gmra.mxu0 %v375
        %v395 = vpop.f32.mrf.mxu0
        %v396 = vadd.f32 0.0, %v395
        %v397 = vpop.f32.mrf.mxu0
        %v398 = vadd.f32 0.0, %v397
        %399 = vmatmul.bf16.gmra.mxu0 %v378
        %v400 = vpop.f32.mrf.mxu0
        %v401 = vadd.f32 0.0, %v400
        %v402 = vpop.f32.mrf.mxu0
        %v403 = vadd.f32 0.0, %v402
        %404 = vmatmul.bf16.gmra.mxu0 %v381
        %v405 = vpop.f32.mrf.mxu0
        %v406 = vadd.f32 0.0, %v405
        %v407 = vpop.f32.mrf.mxu0
        %v408 = vadd.f32 0.0, %v407
        %409 = vmatmul.bf16.gmra.mxu0 %v384
        %v410 = vpop.f32.mrf.mxu0
        %v411 = vadd.f32 0.0, %v410
        %v412 = vpop.f32.mrf.mxu0
        %v413 = vadd.f32 0.0, %v412
        %414 = vdwg.mxu0
        %415 = vmatpush.bf16.msra.mxu0 0
        %416 = vmatpush.bf16.msra.mxu0 0
        %417 = vmatpush.bf16.msra.mxu0 0
        %418 = vmatpush.bf16.msra.mxu0 0
        %419 = vmatpush.bf16.msra.mxu0 0
        %420 = vmatpush.bf16.msra.mxu0 0
        %421 = vmatpush.bf16.msra.mxu0 %v350
        %422 = vmatpush.bf16.msra.mxu0 %v342
        %423 = vmatmul.bf16.gmra.mxu0 %v375
        %v424 = vpop.f32.mrf.mxu0
        %v425 = vadd.f32 0.0, %v424
        %v426 = vpop.f32.mrf.mxu0
        %v427 = vadd.f32 0.0, %v426
        %428 = vmatmul.bf16.gmra.mxu0 %v378
        %v429 = vpop.f32.mrf.mxu0
        %v430 = vadd.f32 0.0, %v429
        %v431 = vpop.f32.mrf.mxu0
        %v432 = vadd.f32 0.0, %v431
        %433 = vmatmul.bf16.gmra.mxu0 %v381
        %v434 = vpop.f32.mrf.mxu0
        %v435 = vadd.f32 0.0, %v434
        %v436 = vpop.f32.mrf.mxu0
        %v437 = vadd.f32 0.0, %v436
        %438 = vmatmul.bf16.gmra.mxu0 %v384
        %v439 = vpop.f32.mrf.mxu0
        %v440 = vadd.f32 0.0, %v439
        %v441 = vpop.f32.mrf.mxu0
        %v442 = vadd.f32 0.0, %v441
        %443 = vdwg.mxu0
        %444 = vmatpush.bf16.msra.mxu0 0
        %445 = vmatpush.bf16.msra.mxu0 0
        %446 = vmatpush.bf16.msra.mxu0 0
        %447 = vmatpush.bf16.msra.mxu0 0
        %448 = vmatpush.bf16.msra.mxu0 0
        %449 = vmatpush.bf16.msra.mxu0 0
        %450 = vmatpush.bf16.msra.mxu0 %v351
        %451 = vmatpush.bf16.msra.mxu0 %v343
        %452 = vmatmul.bf16.gmra.mxu0 %v375
        %v453 = vpop.f32.mrf.mxu0
        %v454 = vadd.f32 0.0, %v453
        %v455 = vpop.f32.mrf.mxu0
        %v456 = vadd.f32 0.0, %v455
        %457 = vmatmul.bf16.gmra.mxu0 %v378
        %v458 = vpop.f32.mrf.mxu0
        %v459 = vadd.f32 0.0, %v458
        %v460 = vpop.f32.mrf.mxu0
        %v461 = vadd.f32 0.0, %v460
        %462 = vmatmul.bf16.gmra.mxu0 %v381
        %v463 = vpop.f32.mrf.mxu0
        %v464 = vadd.f32 0.0, %v463
        %v465 = vpop.f32.mrf.mxu0
        %v466 = vadd.f32 0.0, %v465
        %467 = vmatmul.bf16.gmra.mxu0 %v384
        %v468 = vpop.f32.mrf.mxu0
        %v469 = vadd.f32 0.0, %v468
        %v470 = vpop.f32.mrf.mxu0
        %v471 = vadd.f32 0.0, %v470
        %472 = vdwg.mxu0
        %473 = vmatpush.bf16.msra.mxu0 0
        %474 = vmatpush.bf16.msra.mxu0 0
        %475 = vmatpush.bf16.msra.mxu0 0
        %476 = vmatpush.bf16.msra.mxu0 0
        %477 = vmatpush.bf16.msra.mxu0 0
        %478 = vmatpush.bf16.msra.mxu0 0
        %479 = vmatpush.bf16.msra.mxu0 %v352
        %480 = vmatpush.bf16.msra.mxu0 %v344
        %481 = vmatmul.bf16.gmra.mxu0 %v375
        %v482 = vpop.f32.mrf.mxu0
        %v483 = vadd.f32 0.0, %v482
        %v484 = vpop.f32.mrf.mxu0
        %v485 = vadd.f32 0.0, %v484
        %486 = vmatmul.bf16.gmra.mxu0 %v378
        %v487 = vpop.f32.mrf.mxu0
        %v488 = vadd.f32 0.0, %v487
        %v489 = vpop.f32.mrf.mxu0
        %v490 = vadd.f32 0.0, %v489
        %491 = vmatmul.bf16.gmra.mxu0 %v381
        %v492 = vpop.f32.mrf.mxu0
        %v493 = vadd.f32 0.0, %v492
        %v494 = vpop.f32.mrf.mxu0
        %v495 = vadd.f32 0.0, %v494
        %496 = vmatmul.bf16.gmra.mxu0 %v384
        %v497 = vpop.f32.mrf.mxu0
        %v498 = vadd.f32 0.0, %v497
        %v499 = vpop.f32.mrf.mxu0
        %v500 = vadd.f32 0.0, %v499
        %501 = vdwg.mxu0
        %502 = vmatpush.bf16.msra.mxu0 0
        %503 = vmatpush.bf16.msra.mxu0 0
        %504 = vmatpush.bf16.msra.mxu0 0
        %505 = vmatpush.bf16.msra.mxu0 0
        %506 = vmatpush.bf16.msra.mxu0 0
        %507 = vmatpush.bf16.msra.mxu0 0
        %508 = vmatpush.bf16.msra.mxu0 %v353
        %509 = vmatpush.bf16.msra.mxu0 %v345
        %510 = vmatmul.bf16.gmra.mxu0 %v375
        %v511 = vpop.f32.mrf.mxu0
        %v512 = vadd.f32 0.0, %v511
        %v513 = vpop.f32.mrf.mxu0
        %v514 = vadd.f32 0.0, %v513
        %515 = vmatmul.bf16.gmra.mxu0 %v378
        %v516 = vpop.f32.mrf.mxu0
        %v517 = vadd.f32 0.0, %v516
        %v518 = vpop.f32.mrf.mxu0
        %v519 = vadd.f32 0.0, %v518
        %520 = vmatmul.bf16.gmra.mxu0 %v381
        %v521 = vpop.f32.mrf.mxu0
        %v522 = vadd.f32 0.0, %v521
        %v523 = vpop.f32.mrf.mxu0
        %v524 = vadd.f32 0.0, %v523
        %525 = vmatmul.bf16.gmra.mxu0 %v384
        %v526 = vpop.f32.mrf.mxu0
        %v527 = vadd.f32 0.0, %v526
        %v528 = vpop.f32.mrf.mxu0
        %v529 = vadd.f32 0.0, %v528
        %530 = vdwg.mxu0
        %531 = vmatpush.bf16.msra.mxu0 0
        %532 = vmatpush.bf16.msra.mxu0 0
        %533 = vmatpush.bf16.msra.mxu0 0
        %534 = vmatpush.bf16.msra.mxu0 0
        %535 = vmatpush.bf16.msra.mxu0 0
        %536 = vmatpush.bf16.msra.mxu0 0
        %537 = vmatpush.bf16.msra.mxu0 %v354
        %538 = vmatpush.bf16.msra.mxu0 %v346
        %539 = vmatmul.bf16.gmra.mxu0 %v375
        %v540 = vpop.f32.mrf.mxu0
        %v541 = vadd.f32 0.0, %v540
        %v542 = vpop.f32.mrf.mxu0
        %v543 = vadd.f32 0.0, %v542
        %544 = vmatmul.bf16.gmra.mxu0 %v378
        %v545 = vpop.f32.mrf.mxu0
        %v546 = vadd.f32 0.0, %v545
        %v547 = vpop.f32.mrf.mxu0
        %v548 = vadd.f32 0.0, %v547
        %549 = vmatmul.bf16.gmra.mxu0 %v381
        %v550 = vpop.f32.mrf.mxu0
        %v551 = vadd.f32 0.0, %v550
        %v552 = vpop.f32.mrf.mxu0
        %v553 = vadd.f32 0.0, %v552
        %554 = vmatmul.bf16.gmra.mxu0 %v384
        %v555 = vpop.f32.mrf.mxu0
        %v556 = vadd.f32 0.0, %v555
        %v557 = vpop.f32.mrf.mxu0
        %v558 = vadd.f32 0.0, %v557
        %559 = vdwg.mxu0
        %560 = vmatpush.bf16.msra.mxu0 0
        %561 = vmatpush.bf16.msra.mxu0 0
        %562 = vmatpush.bf16.msra.mxu0 0
        %563 = vmatpush.bf16.msra.mxu0 0
        %564 = vmatpush.bf16.msra.mxu0 0
        %565 = vmatpush.bf16.msra.mxu0 0
        %566 = vmatpush.bf16.msra.mxu0 %v355
        %567 = vmatpush.bf16.msra.mxu0 %v347
        %568 = vmatmul.bf16.gmra.mxu0 %v375
        %v569 = vpop.f32.mrf.mxu0
        %v570 = vadd.f32 0.0, %v569
        %v571 = vpop.f32.mrf.mxu0
        %v572 = vadd.f32 0.0, %v571
        %573 = vmatmul.bf16.gmra.mxu0 %v378
        %v574 = vpop.f32.mrf.mxu0
        %v575 = vadd.f32 0.0, %v574
        %v576 = vpop.f32.mrf.mxu0
        %v577 = vadd.f32 0.0, %v576
        %578 = vmatmul.bf16.gmra.mxu0 %v381
        %v579 = vpop.f32.mrf.mxu0
        %v580 = vadd.f32 0.0, %v579
        %v581 = vpop.f32.mrf.mxu0
        %v582 = vadd.f32 0.0, %v581
        %583 = vmatmul.bf16.gmra.mxu0 %v384
        %v584 = vpop.f32.mrf.mxu0
        %v585 = vadd.f32 0.0, %v584
        %v586 = vpop.f32.mrf.mxu0
        %v587 = vadd.f32 0.0, %v586
        %588 = vdwg.mxu0
        %589 = vmatpush.bf16.msra.mxu0 0
        %590 = vmatpush.bf16.msra.mxu0 0
        %591 = vmatpush.bf16.msra.mxu0 0
        %592 = vmatpush.bf16.msra.mxu0 0
        %593 = vmatpush.bf16.msra.mxu0 0
        %594 = vmatpush.bf16.msra.mxu0 0
        %595 = vmatpush.bf16.msra.mxu0 %v356
        %596 = vmatpush.bf16.msra.mxu0 %v348
        %597 = vmatmul.bf16.gmra.mxu0 %v375
        %v598 = vpop.f32.mrf.mxu0
        %v599 = vadd.f32 0.0, %v598
        %v600 = vpop.f32.mrf.mxu0
        %v601 = vadd.f32 0.0, %v600
        %602 = vmatmul.bf16.gmra.mxu0 %v378
        %v603 = vpop.f32.mrf.mxu0
        %v604 = vadd.f32 0.0, %v603
        %v605 = vpop.f32.mrf.mxu0
        %v606 = vadd.f32 0.0, %v605
        %607 = vmatmul.bf16.gmra.mxu0 %v381
        %v608 = vpop.f32.mrf.mxu0
        %v609 = vadd.f32 0.0, %v608
        %v610 = vpop.f32.mrf.mxu0
        %v611 = vadd.f32 0.0, %v610
        %612 = vmatmul.bf16.gmra.mxu0 %v384
        %v613 = vpop.f32.mrf.mxu0
        %v614 = vadd.f32 0.0, %v613
        %v615 = vpop.f32.mrf.mxu0
        %v616 = vadd.f32 0.0, %v615
        %617 = vdwg.mxu0
        %v618 = vmax.f32 %v396, 0.0
        %v619 = vmax.f32 %v425, 0.0
        %v620 = vmax.f32 %v454, 0.0
        %v621 = vmax.f32 %v483, 0.0
        %v622 = vmax.f32 %v512, 0.0
        %v623 = vmax.f32 %v541, 0.0
        %v624 = vmax.f32 %v570, 0.0
        %v625 = vmax.f32 %v599, 0.0
        %v626 = vmax.f32 %v398, 0.0
        %v627 = vmax.f32 %v427, 0.0
        %v628 = vmax.f32 %v456, 0.0
        %v629 = vmax.f32 %v485, 0.0
        %v630 = vmax.f32 %v514, 0.0
        %v631 = vmax.f32 %v543, 0.0
        %v632 = vmax.f32 %v572, 0.0
        %v633 = vmax.f32 %v601, 0.0
        %v634 = vmax.f32 %v401, 0.0
        %v635 = vmax.f32 %v430, 0.0
        %v636 = vmax.f32 %v459, 0.0
        %v637 = vmax.f32 %v488, 0.0
        %v638 = vmax.f32 %v517, 0.0
        %v639 = vmax.f32 %v546, 0.0
        %v640 = vmax.f32 %v575, 0.0
        %v641 = vmax.f32 %v604, 0.0
        %v642 = vmax.f32 %v403, 0.0
        %v643 = vmax.f32 %v432, 0.0
        %v644 = vmax.f32 %v461, 0.0
        %v645 = vmax.f32 %v490, 0.0
        %v646 = vmax.f32 %v519, 0.0
        %v647 = vmax.f32 %v548, 0.0
        %v648 = vmax.f32 %v577, 0.0
        %v649 = vmax.f32 %v606, 0.0
        %v650 = vmax.f32 %v406, 0.0
        %v651 = vmax.f32 %v435, 0.0
        %v652 = vmax.f32 %v464, 0.0
        %v653 = vmax.f32 %v493, 0.0
        %v654 = vmax.f32 %v522, 0.0
        %v655 = vmax.f32 %v551, 0.0
        %v656 = vmax.f32 %v580, 0.0
        %v657 = vmax.f32 %v609, 0.0
        %v658 = vmax.f32 %v408, 0.0
        %v659 = vmax.f32 %v437, 0.0
        %v660 = vmax.f32 %v466, 0.0
        %v661 = vmax.f32 %v495, 0.0
        %v662 = vmax.f32 %v524, 0.0
        %v663 = vmax.f32 %v553, 0.0
        %v664 = vmax.f32 %v582, 0.0
        %v665 = vmax.f32 %v611, 0.0
        %v666 = vmax.f32 %v411, 0.0
        %v667 = vmax.f32 %v440, 0.0
        %v668 = vmax.f32 %v469, 0.0
        %v669 = vmax.f32 %v498, 0.0
        %v670 = vmax.f32 %v527, 0.0
        %v671 = vmax.f32 %v556, 0.0
        %v672 = vmax.f32 %v585, 0.0
        %v673 = vmax.f32 %v614, 0.0
        %v674 = vmax.f32 %v413, 0.0
        %v675 = vmax.f32 %v442, 0.0
        %v676 = vmax.f32 %v471, 0.0
        %v677 = vmax.f32 %v500, 0.0
        %v678 = vmax.f32 %v529, 0.0
        %v679 = vmax.f32 %v558, 0.0
        %v680 = vmax.f32 %v587, 0.0
        %v681 = vmax.f32 %v616, 0.0
        %v682 = vpack.c.bf16 %v626, %v618
        %v683 = vpack.c.bf16 %v627, %v619
        %v684 = vpack.c.bf16 %v628, %v620
        %v685 = vpack.c.bf16 %v629, %v621
        %v686 = vpack.c.bf16 %v630, %v622
        %v687 = vpack.c.bf16 %v631, %v623
        %v688 = vpack.c.bf16 %v632, %v624
        %v689 = vpack.c.bf16 %v633, %v625
        %v690 = vpack.c.bf16 %v642, %v634
        %v691 = vpack.c.bf16 %v643, %v635
        %v692 = vpack.c.bf16 %v644, %v636
        %v693 = vpack.c.bf16 %v645, %v637
        %v694 = vpack.c.bf16 %v646, %v638
        %v695 = vpack.c.bf16 %v647, %v639
        %v696 = vpack.c.bf16 %v648, %v640
        %v697 = vpack.c.bf16 %v649, %v641
        %v698 = vpack.c.bf16 %v658, %v650
        %v699 = vpack.c.bf16 %v659, %v651
        %v700 = vpack.c.bf16 %v660, %v652
        %v701 = vpack.c.bf16 %v661, %v653
        %v702 = vpack.c.bf16 %v662, %v654
        %v703 = vpack.c.bf16 %v663, %v655
        %v704 = vpack.c.bf16 %v664, %v656
        %v705 = vpack.c.bf16 %v665, %v657
        %v706 = vpack.c.bf16 %v674, %v666
        %v707 = vpack.c.bf16 %v675, %v667
        %v708 = vpack.c.bf16 %v676, %v668
        %v709 = vpack.c.bf16 %v677, %v669
        %v710 = vpack.c.bf16 %v678, %v670
        %v711 = vpack.c.bf16 %v679, %v671
        %v712 = vpack.c.bf16 %v680, %v672
        %v713 = vpack.c.bf16 %v681, %v673
        %v714 = vld [vmem:[%s2] sm:$0xf]
        %v715 = vld [vmem:[%s2 + $0x4] sm:$0xf]
        %v716 = vld [vmem:[%s2 + $0x8] sm:$0xf]
        %v717 = vld [vmem:[%s2 + $0xc] sm:$0xf]
        %v718 = vld [vmem:[%s2 + $0x10] sm:$0xf]
        %v719 = vld [vmem:[%s2 + $0x14] sm:$0xf]
        %v720 = vld [vmem:[%s2 + $0x18] sm:$0xf]
        %v721 = vld [vmem:[%s2 + $0x1c] sm:$0xf]
        %v730 = vunpack.c.l.b16 %v714
        %v731 = vunpack.c.l.b16 %v715
        %v732 = vunpack.c.l.b16 %v716
        %v733 = vunpack.c.l.b16 %v717
        %v734 = vunpack.c.l.b16 %v718
        %v735 = vunpack.c.l.b16 %v719
        %v736 = vunpack.c.l.b16 %v720
        %v737 = vunpack.c.l.b16 %v721
        %v738 = vpack.c.b16 %v731, %v730
        %v739 = vpack.c.b16 %v733, %v732
        %v740 = vpack.c.b16 %v735, %v734
        %v741 = vpack.c.b16 %v737, %v736
        %vm742 = vcmask 523264
        %v744 = vsel %vm742, %v738, 0
        %v747 = vsel %vm742, %v739, 0
        %v750 = vsel %vm742, %v740, 0
        %v753 = vsel %vm742, %v741, 0
        %755 = vmatpush.bf16.msra.mxu0 0
        %756 = vmatpush.bf16.msra.mxu0 0
        %757 = vmatpush.bf16.msra.mxu0 0
        %758 = vmatpush.bf16.msra.mxu0 0
        %759 = vmatpush.bf16.msra.mxu0 %v706
        %760 = vmatpush.bf16.msra.mxu0 %v698
        %761 = vmatpush.bf16.msra.mxu0 %v690
        %762 = vmatpush.bf16.msra.mxu0 %v682
        %763 = vmatmul.bf16.gmra.mxu0 %v744
        %v764 = vpop.f32.mrf.mxu0
        %v765 = vadd.f32 0.0, %v764
        %v766 = vpop.f32.mrf.mxu0
        %v767 = vadd.f32 0.0, %v766
        %768 = vmatmul.bf16.gmra.mxu0 %v747
        %v769 = vpop.f32.mrf.mxu0
        %v770 = vadd.f32 0.0, %v769
        %v771 = vpop.f32.mrf.mxu0
        %v772 = vadd.f32 0.0, %v771
        %773 = vmatmul.bf16.gmra.mxu0 %v750
        %v774 = vpop.f32.mrf.mxu0
        %v775 = vadd.f32 0.0, %v774
        %v776 = vpop.f32.mrf.mxu0
        %v777 = vadd.f32 0.0, %v776
        %778 = vmatmul.bf16.gmra.mxu0 %v753
        %v779 = vpop.f32.mrf.mxu0
        %v780 = vadd.f32 0.0, %v779
        %v781 = vpop.f32.mrf.mxu0
        %v782 = vadd.f32 0.0, %v781
        %783 = vdwg.mxu0
        %784 = vmatpush.bf16.msra.mxu0 0
        %785 = vmatpush.bf16.msra.mxu0 0
        %786 = vmatpush.bf16.msra.mxu0 0
        %787 = vmatpush.bf16.msra.mxu0 0
        %788 = vmatpush.bf16.msra.mxu0 %v707
        %789 = vmatpush.bf16.msra.mxu0 %v699
        %790 = vmatpush.bf16.msra.mxu0 %v691
        %791 = vmatpush.bf16.msra.mxu0 %v683
        %792 = vmatmul.bf16.gmra.mxu0 %v744
        %v793 = vpop.f32.mrf.mxu0
        %v794 = vadd.f32 0.0, %v793
        %v795 = vpop.f32.mrf.mxu0
        %v796 = vadd.f32 0.0, %v795
        %797 = vmatmul.bf16.gmra.mxu0 %v747
        %v798 = vpop.f32.mrf.mxu0
        %v799 = vadd.f32 0.0, %v798
        %v800 = vpop.f32.mrf.mxu0
        %v801 = vadd.f32 0.0, %v800
        %802 = vmatmul.bf16.gmra.mxu0 %v750
        %v803 = vpop.f32.mrf.mxu0
        %v804 = vadd.f32 0.0, %v803
        %v805 = vpop.f32.mrf.mxu0
        %v806 = vadd.f32 0.0, %v805
        %807 = vmatmul.bf16.gmra.mxu0 %v753
        %v808 = vpop.f32.mrf.mxu0
        %v809 = vadd.f32 0.0, %v808
        %v810 = vpop.f32.mrf.mxu0
        %v811 = vadd.f32 0.0, %v810
        %812 = vdwg.mxu0
        %813 = vmatpush.bf16.msra.mxu0 0
        %814 = vmatpush.bf16.msra.mxu0 0
        %815 = vmatpush.bf16.msra.mxu0 0
        %816 = vmatpush.bf16.msra.mxu0 0
        %817 = vmatpush.bf16.msra.mxu0 %v708
        %818 = vmatpush.bf16.msra.mxu0 %v700
        %819 = vmatpush.bf16.msra.mxu0 %v692
        %820 = vmatpush.bf16.msra.mxu0 %v684
        %821 = vmatmul.bf16.gmra.mxu0 %v744
        %v822 = vpop.f32.mrf.mxu0
        %v823 = vadd.f32 0.0, %v822
        %v824 = vpop.f32.mrf.mxu0
        %v825 = vadd.f32 0.0, %v824
        %826 = vmatmul.bf16.gmra.mxu0 %v747
        %v827 = vpop.f32.mrf.mxu0
        %v828 = vadd.f32 0.0, %v827
        %v829 = vpop.f32.mrf.mxu0
        %v830 = vadd.f32 0.0, %v829
        %831 = vmatmul.bf16.gmra.mxu0 %v750
        %v832 = vpop.f32.mrf.mxu0
        %v833 = vadd.f32 0.0, %v832
        %v834 = vpop.f32.mrf.mxu0
        %v835 = vadd.f32 0.0, %v834
        %836 = vmatmul.bf16.gmra.mxu0 %v753
        %v837 = vpop.f32.mrf.mxu0
        %v838 = vadd.f32 0.0, %v837
        %v839 = vpop.f32.mrf.mxu0
        %v840 = vadd.f32 0.0, %v839
        %841 = vdwg.mxu0
        %842 = vmatpush.bf16.msra.mxu0 0
        %843 = vmatpush.bf16.msra.mxu0 0
        %844 = vmatpush.bf16.msra.mxu0 0
        %845 = vmatpush.bf16.msra.mxu0 0
        %846 = vmatpush.bf16.msra.mxu0 %v709
        %847 = vmatpush.bf16.msra.mxu0 %v701
        %848 = vmatpush.bf16.msra.mxu0 %v693
        %849 = vmatpush.bf16.msra.mxu0 %v685
        %850 = vmatmul.bf16.gmra.mxu0 %v744
        %v851 = vpop.f32.mrf.mxu0
        %v852 = vadd.f32 0.0, %v851
        %v853 = vpop.f32.mrf.mxu0
        %v854 = vadd.f32 0.0, %v853
        %855 = vmatmul.bf16.gmra.mxu0 %v747
        %v856 = vpop.f32.mrf.mxu0
        %v857 = vadd.f32 0.0, %v856
        %v858 = vpop.f32.mrf.mxu0
        %v859 = vadd.f32 0.0, %v858
        %860 = vmatmul.bf16.gmra.mxu0 %v750
        %v861 = vpop.f32.mrf.mxu0
        %v862 = vadd.f32 0.0, %v861
        %v863 = vpop.f32.mrf.mxu0
        %v864 = vadd.f32 0.0, %v863
        %865 = vmatmul.bf16.gmra.mxu0 %v753
        %v866 = vpop.f32.mrf.mxu0
        %v867 = vadd.f32 0.0, %v866
        %v868 = vpop.f32.mrf.mxu0
        %v869 = vadd.f32 0.0, %v868
        %870 = vdwg.mxu0
        %871 = vmatpush.bf16.msra.mxu0 0
        %872 = vmatpush.bf16.msra.mxu0 0
        %873 = vmatpush.bf16.msra.mxu0 0
        %874 = vmatpush.bf16.msra.mxu0 0
        %875 = vmatpush.bf16.msra.mxu0 %v710
        %876 = vmatpush.bf16.msra.mxu0 %v702
        %877 = vmatpush.bf16.msra.mxu0 %v694
        %878 = vmatpush.bf16.msra.mxu0 %v686
        %879 = vmatmul.bf16.gmra.mxu0 %v744
        %v880 = vpop.f32.mrf.mxu0
        %v881 = vadd.f32 0.0, %v880
        %v882 = vpop.f32.mrf.mxu0
        %v883 = vadd.f32 0.0, %v882
        %884 = vmatmul.bf16.gmra.mxu0 %v747
        %v885 = vpop.f32.mrf.mxu0
        %v886 = vadd.f32 0.0, %v885
        %v887 = vpop.f32.mrf.mxu0
        %v888 = vadd.f32 0.0, %v887
        %889 = vmatmul.bf16.gmra.mxu0 %v750
        %v890 = vpop.f32.mrf.mxu0
        %v891 = vadd.f32 0.0, %v890
        %v892 = vpop.f32.mrf.mxu0
        %v893 = vadd.f32 0.0, %v892
        %894 = vmatmul.bf16.gmra.mxu0 %v753
        %v895 = vpop.f32.mrf.mxu0
        %v896 = vadd.f32 0.0, %v895
        %v897 = vpop.f32.mrf.mxu0
        %v898 = vadd.f32 0.0, %v897
        %899 = vdwg.mxu0
        %900 = vmatpush.bf16.msra.mxu0 0
        %901 = vmatpush.bf16.msra.mxu0 0
        %902 = vmatpush.bf16.msra.mxu0 0
        %903 = vmatpush.bf16.msra.mxu0 0
        %904 = vmatpush.bf16.msra.mxu0 %v711
        %905 = vmatpush.bf16.msra.mxu0 %v703
        %906 = vmatpush.bf16.msra.mxu0 %v695
        %907 = vmatpush.bf16.msra.mxu0 %v687
        %908 = vmatmul.bf16.gmra.mxu0 %v744
        %v909 = vpop.f32.mrf.mxu0
        %v910 = vadd.f32 0.0, %v909
        %v911 = vpop.f32.mrf.mxu0
        %v912 = vadd.f32 0.0, %v911
        %913 = vmatmul.bf16.gmra.mxu0 %v747
        %v914 = vpop.f32.mrf.mxu0
        %v915 = vadd.f32 0.0, %v914
        %v916 = vpop.f32.mrf.mxu0
        %v917 = vadd.f32 0.0, %v916
        %918 = vmatmul.bf16.gmra.mxu0 %v750
        %v919 = vpop.f32.mrf.mxu0
        %v920 = vadd.f32 0.0, %v919
        %v921 = vpop.f32.mrf.mxu0
        %v922 = vadd.f32 0.0, %v921
        %923 = vmatmul.bf16.gmra.mxu0 %v753
        %v924 = vpop.f32.mrf.mxu0
        %v925 = vadd.f32 0.0, %v924
        %v926 = vpop.f32.mrf.mxu0
        %v927 = vadd.f32 0.0, %v926
        %928 = vdwg.mxu0
        %929 = vmatpush.bf16.msra.mxu0 0
        %930 = vmatpush.bf16.msra.mxu0 0
        %931 = vmatpush.bf16.msra.mxu0 0
        %932 = vmatpush.bf16.msra.mxu0 0
        %933 = vmatpush.bf16.msra.mxu0 %v712
        %934 = vmatpush.bf16.msra.mxu0 %v704
        %935 = vmatpush.bf16.msra.mxu0 %v696
        %936 = vmatpush.bf16.msra.mxu0 %v688
        %937 = vmatmul.bf16.gmra.mxu0 %v744
        %v938 = vpop.f32.mrf.mxu0
        %v939 = vadd.f32 0.0, %v938
        %v940 = vpop.f32.mrf.mxu0
        %v941 = vadd.f32 0.0, %v940
        %942 = vmatmul.bf16.gmra.mxu0 %v747
        %v943 = vpop.f32.mrf.mxu0
        %v944 = vadd.f32 0.0, %v943
        %v945 = vpop.f32.mrf.mxu0
        %v946 = vadd.f32 0.0, %v945
        %947 = vmatmul.bf16.gmra.mxu0 %v750
        %v948 = vpop.f32.mrf.mxu0
        %v949 = vadd.f32 0.0, %v948
        %v950 = vpop.f32.mrf.mxu0
        %v951 = vadd.f32 0.0, %v950
        %952 = vmatmul.bf16.gmra.mxu0 %v753
        %v953 = vpop.f32.mrf.mxu0
        %v954 = vadd.f32 0.0, %v953
        %v955 = vpop.f32.mrf.mxu0
        %v956 = vadd.f32 0.0, %v955
        %957 = vdwg.mxu0
        %958 = vmatpush.bf16.msra.mxu0 0
        %959 = vmatpush.bf16.msra.mxu0 0
        %960 = vmatpush.bf16.msra.mxu0 0
        %961 = vmatpush.bf16.msra.mxu0 0
        %962 = vmatpush.bf16.msra.mxu0 %v713
        %963 = vmatpush.bf16.msra.mxu0 %v705
        %964 = vmatpush.bf16.msra.mxu0 %v697
        %965 = vmatpush.bf16.msra.mxu0 %v689
        %966 = vmatmul.bf16.gmra.mxu0 %v744
        %v967 = vpop.f32.mrf.mxu0
        %v968 = vadd.f32 0.0, %v967
        %v969 = vpop.f32.mrf.mxu0
        %v970 = vadd.f32 0.0, %v969
        %971 = vmatmul.bf16.gmra.mxu0 %v747
        %v972 = vpop.f32.mrf.mxu0
        %v973 = vadd.f32 0.0, %v972
        %v974 = vpop.f32.mrf.mxu0
        %v975 = vadd.f32 0.0, %v974
        %976 = vmatmul.bf16.gmra.mxu0 %v750
        %v977 = vpop.f32.mrf.mxu0
        %v978 = vadd.f32 0.0, %v977
        %v979 = vpop.f32.mrf.mxu0
        %v980 = vadd.f32 0.0, %v979
        %981 = vmatmul.bf16.gmra.mxu0 %v753
        %v982 = vpop.f32.mrf.mxu0
        %v983 = vadd.f32 0.0, %v982
        %v984 = vpop.f32.mrf.mxu0
        %v985 = vadd.f32 0.0, %v984
        %986 = vdwg.mxu0
        %v987 = vmax.f32 %v765, 0.0
        %v988 = vmax.f32 %v794, 0.0
        %v989 = vmax.f32 %v823, 0.0
        %v990 = vmax.f32 %v852, 0.0
        %v991 = vmax.f32 %v881, 0.0
        %v992 = vmax.f32 %v910, 0.0
        %v993 = vmax.f32 %v939, 0.0
        %v994 = vmax.f32 %v968, 0.0
        %v995 = vmax.f32 %v767, 0.0
        %v996 = vmax.f32 %v796, 0.0
        %v997 = vmax.f32 %v825, 0.0
        %v998 = vmax.f32 %v854, 0.0
        %v999 = vmax.f32 %v883, 0.0
        %v1000 = vmax.f32 %v912, 0.0
        %v1001 = vmax.f32 %v941, 0.0
        %v1002 = vmax.f32 %v970, 0.0
        %v1003 = vmax.f32 %v770, 0.0
        %v1004 = vmax.f32 %v799, 0.0
        %v1005 = vmax.f32 %v828, 0.0
        %v1006 = vmax.f32 %v857, 0.0
        %v1007 = vmax.f32 %v886, 0.0
        %v1008 = vmax.f32 %v915, 0.0
        %v1009 = vmax.f32 %v944, 0.0
        %v1010 = vmax.f32 %v973, 0.0
        %v1011 = vmax.f32 %v772, 0.0
        %v1012 = vmax.f32 %v801, 0.0
        %v1013 = vmax.f32 %v830, 0.0
        %v1014 = vmax.f32 %v859, 0.0
        %v1015 = vmax.f32 %v888, 0.0
        %v1016 = vmax.f32 %v917, 0.0
        %v1017 = vmax.f32 %v946, 0.0
        %v1018 = vmax.f32 %v975, 0.0
        %v1019 = vmax.f32 %v775, 0.0
        %v1020 = vmax.f32 %v804, 0.0
        %v1021 = vmax.f32 %v833, 0.0
        %v1022 = vmax.f32 %v862, 0.0
        %v1023 = vmax.f32 %v891, 0.0
        %v1024 = vmax.f32 %v920, 0.0
        %v1025 = vmax.f32 %v949, 0.0
        %v1026 = vmax.f32 %v978, 0.0
        %v1027 = vmax.f32 %v777, 0.0
        %v1028 = vmax.f32 %v806, 0.0
        %v1029 = vmax.f32 %v835, 0.0
        %v1030 = vmax.f32 %v864, 0.0
        %v1031 = vmax.f32 %v893, 0.0
        %v1032 = vmax.f32 %v922, 0.0
        %v1033 = vmax.f32 %v951, 0.0
        %v1034 = vmax.f32 %v980, 0.0
        %v1035 = vmax.f32 %v780, 0.0
        %v1036 = vmax.f32 %v809, 0.0
        %v1037 = vmax.f32 %v838, 0.0
        %v1038 = vmax.f32 %v867, 0.0
        %v1039 = vmax.f32 %v896, 0.0
        %v1040 = vmax.f32 %v925, 0.0
        %v1041 = vmax.f32 %v954, 0.0
        %v1042 = vmax.f32 %v983, 0.0
        %v1043 = vmax.f32 %v782, 0.0
        %v1044 = vmax.f32 %v811, 0.0
        %v1045 = vmax.f32 %v840, 0.0
        %v1046 = vmax.f32 %v869, 0.0
        %v1047 = vmax.f32 %v898, 0.0
        %v1048 = vmax.f32 %v927, 0.0
        %v1049 = vmax.f32 %v956, 0.0
        %v1050 = vmax.f32 %v985, 0.0
        %v1051 = vld [vmem:[%s3] sm:$0xff]
        %v1052 = vld [vmem:[%s3 + $0x8] sm:$0xff]
        %v1053 = vld [vmem:[%s3 + $0x10] sm:$0xff]
        %v1054 = vld [vmem:[%s3 + $0x18] sm:$0xff]
        %v1055 = vld [vmem:[%s3 + $0x20] sm:$0xff]
        %v1056 = vld [vmem:[%s3 + $0x28] sm:$0xff]
        %v1057 = vld [vmem:[%s3 + $0x30] sm:$0xff]
        %v1058 = vld [vmem:[%s3 + $0x38] sm:$0xff]
        %1060 = vset.pattern.permute.xlu0 0
        %1061 = vperm.xlu0 %1060, %v1051
        %v1062 = vpop.permute.xlu0 %1061
        %1065 = vset.pattern.permute.xlu0 0
        %1066 = vperm.xlu0 %1065, %v1052
        %v1067 = vpop.permute.xlu0 %1066
        %1070 = vset.pattern.permute.xlu0 0
        %1071 = vperm.xlu0 %1070, %v1053
        %v1072 = vpop.permute.xlu0 %1071
        %1075 = vset.pattern.permute.xlu0 0
        %1076 = vperm.xlu0 %1075, %v1054
        %v1077 = vpop.permute.xlu0 %1076
        %1080 = vset.pattern.permute.xlu0 0
        %1081 = vperm.xlu0 %1080, %v1055
        %v1082 = vpop.permute.xlu0 %1081
        %1085 = vset.pattern.permute.xlu0 0
        %1086 = vperm.xlu0 %1085, %v1056
        %v1087 = vpop.permute.xlu0 %1086
        %1090 = vset.pattern.permute.xlu0 0
        %1091 = vperm.xlu0 %1090, %v1057
        %v1092 = vpop.permute.xlu0 %1091
        %1095 = vset.pattern.permute.xlu0 0
        %1096 = vperm.xlu0 %1095, %v1058
        %v1097 = vpop.permute.xlu0 %1096
        %v1099 = vmul.f32 %v987, %v1062
        %v1100 = vmul.f32 %v988, %v1062
        %v1101 = vmul.f32 %v989, %v1062
        %v1102 = vmul.f32 %v990, %v1062
        %v1103 = vmul.f32 %v991, %v1062
        %v1104 = vmul.f32 %v992, %v1062
        %v1105 = vmul.f32 %v993, %v1062
        %v1106 = vmul.f32 %v994, %v1062
        %v1107 = vmul.f32 %v995, %v1067
        %v1108 = vmul.f32 %v996, %v1067
        %v1109 = vmul.f32 %v997, %v1067
        %v1110 = vmul.f32 %v998, %v1067
        %v1111 = vmul.f32 %v999, %v1067
        %v1112 = vmul.f32 %v1000, %v1067
        %v1113 = vmul.f32 %v1001, %v1067
        %v1114 = vmul.f32 %v1002, %v1067
        %v1115 = vmul.f32 %v1003, %v1072
        %v1116 = vmul.f32 %v1004, %v1072
        %v1117 = vmul.f32 %v1005, %v1072
        %v1118 = vmul.f32 %v1006, %v1072
        %v1119 = vmul.f32 %v1007, %v1072
        %v1120 = vmul.f32 %v1008, %v1072
        %v1121 = vmul.f32 %v1009, %v1072
        %v1122 = vmul.f32 %v1010, %v1072
        %v1123 = vmul.f32 %v1011, %v1077
        %v1124 = vmul.f32 %v1012, %v1077
        %v1125 = vmul.f32 %v1013, %v1077
        %v1126 = vmul.f32 %v1014, %v1077
        %v1127 = vmul.f32 %v1015, %v1077
        %v1128 = vmul.f32 %v1016, %v1077
        %v1129 = vmul.f32 %v1017, %v1077
        %v1130 = vmul.f32 %v1018, %v1077
        %v1131 = vmul.f32 %v1019, %v1082
        %v1132 = vmul.f32 %v1020, %v1082
        %v1133 = vmul.f32 %v1021, %v1082
        %v1134 = vmul.f32 %v1022, %v1082
        %v1135 = vmul.f32 %v1023, %v1082
        %v1136 = vmul.f32 %v1024, %v1082
        %v1137 = vmul.f32 %v1025, %v1082
        %v1138 = vmul.f32 %v1026, %v1082
        %v1139 = vmul.f32 %v1027, %v1087
        %v1140 = vmul.f32 %v1028, %v1087
        %v1141 = vmul.f32 %v1029, %v1087
        %v1142 = vmul.f32 %v1030, %v1087
        %v1143 = vmul.f32 %v1031, %v1087
        %v1144 = vmul.f32 %v1032, %v1087
        %v1145 = vmul.f32 %v1033, %v1087
        %v1146 = vmul.f32 %v1034, %v1087
        %v1147 = vmul.f32 %v1035, %v1092
        %v1148 = vmul.f32 %v1036, %v1092
        %v1149 = vmul.f32 %v1037, %v1092
        %v1150 = vmul.f32 %v1038, %v1092
        %v1151 = vmul.f32 %v1039, %v1092
        %v1152 = vmul.f32 %v1040, %v1092
        %v1153 = vmul.f32 %v1041, %v1092
        %v1154 = vmul.f32 %v1042, %v1092
        %v1155 = vmul.f32 %v1043, %v1097
        %v1156 = vmul.f32 %v1044, %v1097
        %v1157 = vmul.f32 %v1045, %v1097
        %v1158 = vmul.f32 %v1046, %v1097
        %v1159 = vmul.f32 %v1047, %v1097
        %v1160 = vmul.f32 %v1048, %v1097
        %v1161 = vmul.f32 %v1049, %v1097
        %v1162 = vmul.f32 %v1050, %v1097
        %v1163 = vadd.f32 %v1099, %v1107
        %v1164 = vadd.f32 %v1163, %v1115
        %v1165 = vadd.f32 %v1164, %v1123
        %v1166 = vadd.f32 %v1165, %v1131
        %v1167 = vadd.f32 %v1166, %v1139
        %v1168 = vadd.f32 %v1167, %v1147
        %v1169 = vadd.f32 %v1168, %v1155
        %v1170 = vrot.slane %v1169, 4
        %v1171 = vadd.f32 %v1169, %v1170
        %v1172 = vrot.slane %v1171, 2
        %v1173 = vadd.f32 %v1171, %v1172
        %v1174 = vrot.slane %v1173, 1
        %v1175 = vadd.f32 %v1173, %v1174
        %v1176 = vadd.f32 %v1100, %v1108
        %v1177 = vadd.f32 %v1176, %v1116
        %v1178 = vadd.f32 %v1177, %v1124
        %v1179 = vadd.f32 %v1178, %v1132
        %v1180 = vadd.f32 %v1179, %v1140
        %v1181 = vadd.f32 %v1180, %v1148
        %v1182 = vadd.f32 %v1181, %v1156
        %v1183 = vrot.slane %v1182, 4
        %v1184 = vadd.f32 %v1182, %v1183
        %v1185 = vrot.slane %v1184, 2
        %v1186 = vadd.f32 %v1184, %v1185
        %v1187 = vrot.slane %v1186, 1
        %v1188 = vadd.f32 %v1186, %v1187
        %v1189 = vadd.f32 %v1101, %v1109
        %v1190 = vadd.f32 %v1189, %v1117
        %v1191 = vadd.f32 %v1190, %v1125
        %v1192 = vadd.f32 %v1191, %v1133
        %v1193 = vadd.f32 %v1192, %v1141
        %v1194 = vadd.f32 %v1193, %v1149
        %v1195 = vadd.f32 %v1194, %v1157
        %v1196 = vrot.slane %v1195, 4
        %v1197 = vadd.f32 %v1195, %v1196
        %v1198 = vrot.slane %v1197, 2
        %v1199 = vadd.f32 %v1197, %v1198
        %v1200 = vrot.slane %v1199, 1
        %v1201 = vadd.f32 %v1199, %v1200
        %v1202 = vadd.f32 %v1102, %v1110
        %v1203 = vadd.f32 %v1202, %v1118
        %v1204 = vadd.f32 %v1203, %v1126
        %v1205 = vadd.f32 %v1204, %v1134
        %v1206 = vadd.f32 %v1205, %v1142
        %v1207 = vadd.f32 %v1206, %v1150
        %v1208 = vadd.f32 %v1207, %v1158
        %v1209 = vrot.slane %v1208, 4
        %v1210 = vadd.f32 %v1208, %v1209
        %v1211 = vrot.slane %v1210, 2
        %v1212 = vadd.f32 %v1210, %v1211
        %v1213 = vrot.slane %v1212, 1
        %v1214 = vadd.f32 %v1212, %v1213
        %v1215 = vadd.f32 %v1103, %v1111
        %v1216 = vadd.f32 %v1215, %v1119
        %v1217 = vadd.f32 %v1216, %v1127
        %v1218 = vadd.f32 %v1217, %v1135
        %v1219 = vadd.f32 %v1218, %v1143
        %v1220 = vadd.f32 %v1219, %v1151
        %v1221 = vadd.f32 %v1220, %v1159
        %v1222 = vrot.slane %v1221, 4
        %v1223 = vadd.f32 %v1221, %v1222
        %v1224 = vrot.slane %v1223, 2
        %v1225 = vadd.f32 %v1223, %v1224
        %v1226 = vrot.slane %v1225, 1
        %v1227 = vadd.f32 %v1225, %v1226
        %v1228 = vadd.f32 %v1104, %v1112
        %v1229 = vadd.f32 %v1228, %v1120
        %v1230 = vadd.f32 %v1229, %v1128
        %v1231 = vadd.f32 %v1230, %v1136
        %v1232 = vadd.f32 %v1231, %v1144
        %v1233 = vadd.f32 %v1232, %v1152
        %v1234 = vadd.f32 %v1233, %v1160
        %v1235 = vrot.slane %v1234, 4
        %v1236 = vadd.f32 %v1234, %v1235
        %v1237 = vrot.slane %v1236, 2
        %v1238 = vadd.f32 %v1236, %v1237
        %v1239 = vrot.slane %v1238, 1
        %v1240 = vadd.f32 %v1238, %v1239
        %v1241 = vadd.f32 %v1105, %v1113
        %v1242 = vadd.f32 %v1241, %v1121
        %v1243 = vadd.f32 %v1242, %v1129
        %v1244 = vadd.f32 %v1243, %v1137
        %v1245 = vadd.f32 %v1244, %v1145
        %v1246 = vadd.f32 %v1245, %v1153
        %v1247 = vadd.f32 %v1246, %v1161
        %v1248 = vrot.slane %v1247, 4
        %v1249 = vadd.f32 %v1247, %v1248
        %v1250 = vrot.slane %v1249, 2
        %v1251 = vadd.f32 %v1249, %v1250
        %v1252 = vrot.slane %v1251, 1
        %v1253 = vadd.f32 %v1251, %v1252
        %v1254 = vadd.f32 %v1106, %v1114
        %v1255 = vadd.f32 %v1254, %v1122
        %v1256 = vadd.f32 %v1255, %v1130
        %v1257 = vadd.f32 %v1256, %v1138
        %v1258 = vadd.f32 %v1257, %v1146
        %v1259 = vadd.f32 %v1258, %v1154
        %v1260 = vadd.f32 %v1259, %v1162
        %v1261 = vrot.slane %v1260, 4
        %v1262 = vadd.f32 %v1260, %v1261
        %v1263 = vrot.slane %v1262, 2
        %v1264 = vadd.f32 %v1262, %v1263
        %v1265 = vrot.slane %v1264, 1
        %v1266 = vadd.f32 %v1264, %v1265
        %v1275 = vrot.slane %v1188, 7
        %v1276 = vrot.slane %v1201, 6
        %v1277 = vrot.slane %v1214, 5
        %v1278 = vrot.slane %v1227, 4
        %v1279 = vrot.slane %v1240, 3
        %v1280 = vrot.slane %v1253, 2
        %v1281 = vrot.slane %v1266, 1
        %vm1282 = vcmask 1040384
        %v1283 = vsel %vm1282, %v1175, %v1275
        %vm1284 = vcmask 1042434
        %v1285 = vsel %vm1284, %v1276, %v1277
        %vm1286 = vcmask 1041408
        %v1287 = vsel %vm1286, %v1283, %v1285
        %vm1288 = vcmask 1044484
        %v1289 = vsel %vm1288, %v1278, %v1279
        %vm1290 = vcmask 1046534
        %v1291 = vsel %vm1290, %v1280, %v1281
        %vm1292 = vcmask 1045508
        %v1293 = vsel %vm1292, %v1289, %v1291
        %vm1294 = vcmask 1043456
        %v1295 = vsel %vm1294, %v1287, %v1293
        %1297 = vst [vmem:[%s245] sm:$0xff] %v1295
        %s1298 = sand.u32 %s115, 1
        %s1299 = scalar_lea.sflag [#allocation4], %s1298
        %s1300 = sand.u32 %s115, 1
        %s1301 = smul.addr %s1300, 8
        %s1302 = scalar_lea.vmem [#allocation3], %s1301
        // Predicated region
        $region60: #{sdf_forward.1} parent=54 // pred_check
          %p1303 = pneg %p125
        $region61: #{sdf_forward.1} parent=54 // pred_check_branch
          %1305 = sbr.rel (%p1303) target = $region63
        $region62: #{sdf_forward.1} parent=54 // pred_region
          %s1306 = smul.u32 8, %s18
          %1308 = vsyncadd %s1299, 0
          %s1309 = scalar_lea.hbm %s4, %s1306
          %s1311 = sshll.u32 %s1302, 4
          %s1312 = int_to_ptr.vmem [resolvable:$true] %s1311
          %s1313 = sshll.u32 %s1309, 4
          %s1314 = int_to_ptr.hbm [resolvable:$true] %s1313
          %1316 = dma.vmem_to_hbm [thread:$0]  %s1312, 128, %s1314, %s1299
        $region63: #{sdf_forward.1} parent=54 // pred_fallthru
          _
      $region55: #{sdf_forward.1} parent=5 // pred_fallthru
        _
      %p1317 = scmp.le.s32.totalorder 2, %s13
      // Predicated region
      $region64: #{sdf_forward.1} parent=5 // pred_check
        %p1318 = pneg %p1317
      $region65: #{sdf_forward.1} parent=5 // pred_check_branch
        %1320 = sbr.rel (%p1318) target = $region67
      $region66: #{sdf_forward.1} parent=5 // pred_region
        %s1321 = ssub.s32 %s13, 2
        // Predicated region
        $region68: #{sdf_forward.1} parent=66 // pred_check
          %p1322 = pneg %p131
        $region69: #{sdf_forward.1} parent=66 // pred_check_branch
          %1324 = sbr.rel (%p1322) target = $region71
        $region70: #{sdf_forward.1} parent=66 // pred_region
          %s1325 = sand.u32 %s116, 1
          %s1326 = scalar_lea.sflag [#allocation4], %s1325
          %s1327 = sand.u32 %s116, 1
          %s1328 = smul.addr %s1327, 8
          %s1329 = scalar_lea.vmem [#allocation3], %s1328
          %1331 = dma.done %s1326, 128
        $region71: #{sdf_forward.1} parent=66 // pred_fallthru
          _
      $region67: #{sdf_forward.1} parent=5 // pred_fallthru
        _
    $region6: #{sdf_forward.1} parent=1 // loop_footer
      %s17 = sadd.s32 1, %s13
    $region7: #{sdf_forward.1} parent=1 // loop_footer_branch
      %12 = sbr.rel target = $region3
    $region8: #{sdf_forward.1} parent=1 // loop_exit
      _
    %1332 = vsyncpa [#allocation4], 1
    %s1333 = scalar_lea.sflag [#allocation4], 1
    %1334 = vsyncpa %s1333, 1

</llo_original>
